<compile_context>
chip_gen: v7x
topology: tpu7x:2x2x1
jax: 0.10.0
libtpu: 0.0.40
codegen_flags: <defaults>
</compile_context>

<pallas_src>
import functools

import jax
import jax.numpy as jnp
from jax.experimental import pallas as pl
from jax.experimental.pallas import tpu as pltpu

CONTEXT = 5  # same as the PyTorch module's self.context


def _context_kernel(x_hbm, y_hbm, tdata_ref, label_hbm, xbuf, sems,
                    *, context, cut, tile_n):
    # x_hbm:     (N_pad + 2*cut, F)   raw HBM ref
    # y_hbm:     (N_pad + 2*cut, C)   raw HBM ref
    # tdata_ref: (tile_n, context*F)  pipelined VMEM output block (lane-dense)
    # label_hbm: (N_pad, C)           raw HBM ref (output, written by DMA)
    # xbuf:      (tile_n + 2*cut, F)  VMEM staging for the halo'd x tile
    # sems:      DMA semaphores, shape (2,)
    i = pl.program_id(0)
    halo = tile_n + 2 * cut
    row0 = i * tile_n

    # 1) Halo'd x tile: each x row is read from HBM exactly once.
    x_cp = pltpu.make_async_copy(
        x_hbm.at[pl.ds(row0, halo), :], xbuf, sems.at[0])
    x_cp.start()

    # 2) label tile: single contiguous HBM->HBM DMA; overlaps with everything.
    l_cp = pltpu.make_async_copy(
        y_hbm.at[pl.ds(cut + row0, tile_n), :],
        label_hbm.at[pl.ds(row0, tile_n), :],
        sems.at[1],
    )
    l_cp.start()

    # 3) Assemble the lane-dense output tile from VMEM:
    #    out[j, k*F:(k+1)*F] = x[row0 + j + k, :].  Single dense store; the
    #    pipelined writeback then emits one large contiguous HBM DMA per tile.
    x_cp.wait()
    xv = xbuf[...]  # (tile_n + 2*cut, F)
    tdata_ref[...] = jnp.concatenate(
        [xv[k:k + tile_n, :] for k in range(context)], axis=-1)

    # 4) Make sure the label DMA has landed before this step retires.
    l_cp.wait()


def _choose_tile(n_out, f, itemsize, context):
    # VMEM per step ~ double-buffered out block + halo staging
    #              ~ tile * f * (2*context + 1) * itemsize   (+ small halo)
    per_row = itemsize * f * (2 * context + 1)
    cap = max(8, (8 * 1024 * 1024) // max(per_row, 1))   # ~8 MiB budget (safe on v5e)
    tile = min(n_out, 4096, cap)
    if tile < n_out:
        tile = max(8, (tile // 8) * 8)                   # keep (8,128) tiling happy
    return tile


def context_forward(x, y, context=CONTEXT, tile_n=None):
    assert context % 2 == 1, "context value error."
    cut = context // 2
    n, f = x.shape
    c = y.shape[-1]
    n_out = n - 2 * cut
    assert n_out > 0, "sequence too short for the given context."

    itemsize = jnp.dtype(x.dtype).itemsize
    if tile_n is None:
        tile_n = _choose_tile(n_out, f, itemsize, context)
    tile_n = max(1, min(tile_n, n_out))

    # Pad N_out up to a tile multiple so every grid step (and the halo fetch)
    # is full-sized and strictly in bounds; padded rows are sliced off below.
    pad = (-n_out) % tile_n
    n_pad = n_out + pad
    if pad:
        x = jnp.pad(x, ((0, pad), (0, 0)))
        y = jnp.pad(y, ((0, pad), (0, 0)))
    num_tiles = n_pad // tile_n

    kernel = functools.partial(_context_kernel, context=context, cut=cut,
                               tile_n=tile_n)

    y_itemsize = jnp.dtype(y.dtype).itemsize
    cost = pl.CostEstimate(
        flops=0,
        transcendentals=0,
        bytes_accessed=((n_pad + 2 * cut) * f * itemsize      # x read (once)
                        + n_pad * c * y_itemsize              # y read
                        + n_pad * context * f * itemsize      # tData write
                        + n_pad * c * y_itemsize),            # label write
    )

    tdata_flat, label = pl.pallas_call(
        kernel,
        grid=(num_tiles,),
        out_shape=(
            jax.ShapeDtypeStruct((n_pad, context * f), x.dtype),  # lane-dense tData
            jax.ShapeDtypeStruct((n_pad, c), y.dtype),
        ),
        in_specs=[
            pl.BlockSpec(memory_space=pl.ANY),   # x stays in HBM (manual halo DMA)
            pl.BlockSpec(memory_space=pl.ANY),   # y stays in HBM
        ],
        out_specs=(
            pl.BlockSpec((tile_n, context * f), lambda i: (i, 0)),  # pipelined
            pl.BlockSpec(memory_space=pl.ANY),   # label written directly in HBM
        ),
        scratch_shapes=[
            pltpu.VMEM((tile_n + 2 * cut, f), x.dtype),
            pltpu.SemaphoreType.DMA((2,)),
        ],
        compiler_params=pltpu.CompilerParams(
            dimension_semantics=("parallel",)),   # both v7x TCs issue DMA streams
        cost_estimate=cost,
    )(x, y)

    tdata = tdata_flat[:n_out].reshape(n_out, context, f)   # free metadata reshape
    return tdata, label[:n_out]


def _reference(x, y, context=CONTEXT):
    cut = context // 2
    n = x.shape[0]
    tdata = jnp.stack([x[i - cut:i + cut + 1] for i in range(cut, n - cut)], axis=0)
    label = y[cut:n - cut]
    return tdata, label


if __name__ == "__main__":
    key = jax.random.PRNGKey(0)
    kx, ky = jax.random.split(key)

    N, F, C = 16, 32, 8  # small shapes consistent with the forward (N > 2*cut)
    x = jax.random.normal(kx, (N, F), dtype=jnp.float32)
    y = jax.random.normal(ky, (N, C), dtype=jnp.float32)

    ref_tdata, ref_label = _reference(x, y)

    # Default path (single tile for this small N).
    tdata, label = context_forward(x, y)
    jax.block_until_ready((tdata, label))
    assert tdata.shape == (N - 4, CONTEXT, F)
    assert label.shape == (N - 4, C)
    assert jnp.array_equal(tdata, ref_tdata)
    assert jnp.array_equal(label, ref_label)

    # Tiled + padded path (exercises the 1-D grid, halo fetch and pipelined writeback).
    tdata2, label2 = context_forward(x, y, tile_n=8)
    jax.block_until_ready((tdata2, label2))
    assert jnp.array_equal(tdata2, ref_tdata)
    assert jnp.array_equal(label2, ref_label)

    print("KERNEL_OK")
</pallas_src>

<mosaic_0001>
module attributes {stable_mosaic.version = 11 : i64} {
  func.func @_context_kernel(%arg0: i32, %arg1: memref<16x32xf32, #tpu.memory_space<any>>, %arg2: memref<16x8xf32, #tpu.memory_space<any>>, %arg3: memref<12x160xf32, #tpu.memory_space<vmem>>, %arg4: memref<12x8xf32, #tpu.memory_space<any>>, %arg5: memref<16x32xf32, #tpu.memory_space<vmem>>, %arg6: memref<2x!tpu.dma_semaphore, #tpu.memory_space<semaphore_mem>>) attributes {dimension_semantics = [#tpu.dimension_semantics<parallel>], iteration_bounds = array<i64: 1>, scalar_prefetch = 0 : i64, scratch_operands = 2 : i64, tpu.core_type = #tpu.core_type<tc>, window_params = [{}, {}, {transform_indices = @transform_2, window_bounds = array<i64: 12, 160>}, {}]} {
    %c12_i32 = arith.constant 12 : i32
    %0 = arith.muli %arg0, %c12_i32 : i32
    %c0_i32 = arith.constant 0 : i32
    %c0_i32_0 = arith.constant 0 : i32
    %1 = tpu.memref_slice %arg1[%0, %c0_i32_0] : memref<16x32xf32, #tpu.memory_space<any>> -> memref<16x32xf32, #tpu.memory_space<any>>
    %2 = tpu.memref_slice %arg6[%c0_i32] : memref<2x!tpu.dma_semaphore, #tpu.memory_space<semaphore_mem>> -> memref<1x!tpu.dma_semaphore, #tpu.memory_space<semaphore_mem>>
    %3 = tpu.memref_squeeze %2 : memref<1x!tpu.dma_semaphore, #tpu.memory_space<semaphore_mem>> -> memref<!tpu.dma_semaphore, #tpu.memory_space<semaphore_mem>>
    tpu.enqueue_dma source(%1 : memref<16x32xf32, #tpu.memory_space<any>>) target(%arg5 : memref<16x32xf32, #tpu.memory_space<vmem>>) target_semaphore(%3 : memref<!tpu.dma_semaphore, #tpu.memory_space<semaphore_mem>>)
    %c2_i32 = arith.constant 2 : i32
    %4 = arith.addi %c2_i32, %0 : i32
    %c1_i32 = arith.constant 1 : i32
    %c0_i32_1 = arith.constant 0 : i32
    %5 = tpu.memref_slice %arg2[%4, %c0_i32_1] : memref<16x8xf32, #tpu.memory_space<any>> -> memref<12x8xf32, #tpu.memory_space<any>>
    %c0_i32_2 = arith.constant 0 : i32
    %6 = tpu.memref_slice %arg4[%0, %c0_i32_2] : memref<12x8xf32, #tpu.memory_space<any>> -> memref<12x8xf32, #tpu.memory_space<any>>
    %7 = tpu.memref_slice %arg6[%c1_i32] : memref<2x!tpu.dma_semaphore, #tpu.memory_space<semaphore_mem>> -> memref<1x!tpu.dma_semaphore, #tpu.memory_space<semaphore_mem>>
    %8 = tpu.memref_squeeze %7 : memref<1x!tpu.dma_semaphore, #tpu.memory_space<semaphore_mem>> -> memref<!tpu.dma_semaphore, #tpu.memory_space<semaphore_mem>>
    tpu.enqueue_dma source(%5 : memref<12x8xf32, #tpu.memory_space<any>>) target(%6 : memref<12x8xf32, #tpu.memory_space<any>>) target_semaphore(%8 : memref<!tpu.dma_semaphore, #tpu.memory_space<semaphore_mem>>)
    %c0_i32_3 = arith.constant 0 : i32
    %c0_i32_4 = arith.constant 0 : i32
    %9 = tpu.memref_slice %arg1[%0, %c0_i32_4] : memref<16x32xf32, #tpu.memory_space<any>> -> memref<16x32xf32, #tpu.memory_space<any>>
    %10 = tpu.memref_slice %arg6[%c0_i32_3] : memref<2x!tpu.dma_semaphore, #tpu.memory_space<semaphore_mem>> -> memref<1x!tpu.dma_semaphore, #tpu.memory_space<semaphore_mem>>
    %11 = tpu.memref_squeeze %10 : memref<1x!tpu.dma_semaphore, #tpu.memory_space<semaphore_mem>> -> memref<!tpu.dma_semaphore, #tpu.memory_space<semaphore_mem>>
    tpu.wait_dma2 semaphore(%11 : memref<!tpu.dma_semaphore, #tpu.memory_space<semaphore_mem>>) src(%9 : memref<16x32xf32, #tpu.memory_space<any>>) dst(%arg5 : memref<16x32xf32, #tpu.memory_space<vmem>>)
    %c0 = arith.constant 0 : index
    %c0_5 = arith.constant 0 : index
    %12 = vector.load %arg5[%c0, %c0_5] : memref<16x32xf32, #tpu.memory_space<vmem>>, vector<16x32xf32>
    %13 = vector.extract_strided_slice %12 {offsets = [0, 0], sizes = [12, 32], strides = [1, 1]} : vector<16x32xf32> to vector<12x32xf32>
    %14 = vector.extract_strided_slice %12 {offsets = [1, 0], sizes = [12, 32], strides = [1, 1]} : vector<16x32xf32> to vector<12x32xf32>
    %15 = vector.extract_strided_slice %12 {offsets = [2, 0], sizes = [12, 32], strides = [1, 1]} : vector<16x32xf32> to vector<12x32xf32>
    %16 = vector.extract_strided_slice %12 {offsets = [3, 0], sizes = [12, 32], strides = [1, 1]} : vector<16x32xf32> to vector<12x32xf32>
    %17 = vector.extract_strided_slice %12 {offsets = [4, 0], sizes = [12, 32], strides = [1, 1]} : vector<16x32xf32> to vector<12x32xf32>
    %18 = tpu.concatenate %13, %14, %15, %16, %17 in 1 : vector<12x32xf32>, vector<12x32xf32>, vector<12x32xf32>, vector<12x32xf32>, vector<12x32xf32> -> vector<12x160xf32>
    %c0_6 = arith.constant 0 : index
    %c0_7 = arith.constant 0 : index
    %19 = vector.load %arg3[%c0_6, %c0_7] : memref<12x160xf32, #tpu.memory_space<vmem>>, vector<12x160xf32>
    tpu.vector_store %arg3[%c0_6, %c0_7], %18 {strides = array<i32>} : memref<12x160xf32, #tpu.memory_space<vmem>>, vector<12x160xf32>,
    %c1_i32_8 = arith.constant 1 : i32
    %c0_i32_9 = arith.constant 0 : i32
    %20 = tpu.memref_slice %arg2[%4, %c0_i32_9] : memref<16x8xf32, #tpu.memory_space<any>> -> memref<12x8xf32, #tpu.memory_space<any>>
    %c0_i32_10 = arith.constant 0 : i32
    %21 = tpu.memref_slice %arg4[%0, %c0_i32_10] : memref<12x8xf32, #tpu.memory_space<any>> -> memref<12x8xf32, #tpu.memory_space<any>>
    %22 = tpu.memref_slice %arg6[%c1_i32_8] : memref<2x!tpu.dma_semaphore, #tpu.memory_space<semaphore_mem>> -> memref<1x!tpu.dma_semaphore, #tpu.memory_space<semaphore_mem>>
    %23 = tpu.memref_squeeze %22 : memref<1x!tpu.dma_semaphore, #tpu.memory_space<semaphore_mem>> -> memref<!tpu.dma_semaphore, #tpu.memory_space<semaphore_mem>>
    tpu.wait_dma2 semaphore(%23 : memref<!tpu.dma_semaphore, #tpu.memory_space<semaphore_mem>>) src(%20 : memref<12x8xf32, #tpu.memory_space<any>>) dst(%21 : memref<12x8xf32, #tpu.memory_space<any>>)
    return
  }
  func.func @transform_2(%arg0: i32) -> (i32, i32) {
    %c0_i32 = arith.constant 0 : i32
    %c0_i32_0 = arith.constant 0 : i32
    return %arg0, %c0_i32 : i32, i32
  }
}

</mosaic_0001>

<llo_original>
// kernel: tpu_custom_call.1
$region0: #{tpu_custom_call.1}
  #allocation0 [shape = 'u32[]', space=smem, size = 0x4, offset = 0x4, fixed_abs, tag = 'smem constant byte address 0x4 - core index']
  #allocation1 [shape = 'u32[144,128]{1,0:T(1,128)}', space=vmem, size = 0x12000, scoped, tag = 'internal scratch']
  #allocation2 [shape = 'f32[16,32]{1,0:T(8,128)}', space=vmem, size = 0x2000, scoped, tag = 'scratch operand']
  #allocation3 [shape = 's32[2]{0}', space=sflag, size = 0x8, scoped, tag = 'scratch operand']
  #allocation6 [shape = 's32[]', space=sflag, size = 0x4, offset = 0, fixed_abs, tag = 'sflag constant byte address 0x0 - dummy sync flag']
  #allocation7 [shape = 's32[]', space=sflag, size = 0x4, offset = 0, fixed_abs, tag = 'sflag constant byte address 0x0 - dummy sync flag']
  %s0 = inlined_call_operand.vmem [shape: f32[16,32], index: 0, kind: input, shape index: {}]
  %s1 = inlined_call_operand.vmem [shape: f32[16,8], index: 1, kind: input, shape index: {}]
  %s2 = inlined_call_operand.hbm [shape: f32[12,160], index: 2, kind: output, shape index: {0}]
  %s3 = inlined_call_operand.vmem [shape: f32[12,8], index: 3, kind: output, shape index: {1}]
  %4 = xla_tuple %s2, %s3
  %s5 = sld [smem:[#allocation0]]
  $region81: #{tpu_custom_call.1} parent=0
    _
  %s7 = ssub.s32 1, %s5
  %s8 = scalar_select 0, %s7, %s5
  $region1: #{tpu_custom_call.1} parent=0
    #allocation4 [shape = 'u8[16384]{0}', space=vmem, size = 0x4000, scoped, tag = 'output window, operand 0, single buffered']
    #allocation5 [shape = 's32[1]{0}', space=sflag, size = 0x4, scoped, tag = 'scoped memory for tpu_custom_call.1']
    %9 = vsyncpa [#allocation5], 0
    %s10 = smul.u32 0, 12
    %s11 = scalar_lea.vmem %s0, %s10
    %p13 = scmp.lt.u32.totalorder 16, 8
    %p14 = pneg %p13
    // Predicated region
    $region2: #{tpu_custom_call.1} parent=1 // pred_check
      _
    $region3: #{tpu_custom_call.1} parent=1 // pred_check_branch
      %16 = sbr.rel (%p13) target = $region5
    $region4: #{tpu_custom_call.1} parent=1 // pred_region
      %s31 = sand.u32 16, 7
      %p32 = scmp.eq.s32.totalorder %s31, 0
      // Predicated region
      $region17: #{tpu_custom_call.1} parent=4 // pred_check
        %p33 = pneg %p32
      $region18: #{tpu_custom_call.1} parent=4 // pred_check_branch
        %35 = sbr.rel (%p33) target = $region20
      $region19: #{tpu_custom_call.1} parent=4 // pred_region
        loop: start=0, step=1, limit=1
        $region21: #{tpu_custom_call.1} parent=19 // loop_pre_header
          _
        $region22: #{tpu_custom_call.1} parent=19 // loop_header
          %s37 = sphi 0, %s41
          %p38 = scmp.ge.s32.totalorder %s37, 1
          %s42 = sphi %s11, %s11
          %s43 = sphi [#allocation2], [#allocation2]
        $region23: #{tpu_custom_call.1} parent=19 // loop_header_branch
          %40 = sbr.rel (%p38) target = $region27
        $region24: #{tpu_custom_call.1} parent=19 // loop_body
          %v44 = vld [vmem:[%s42] sm:$0xff]
          %45 = vst [vmem:[%s43] sm:$0xff] %v44
          %v46 = vld [vmem:[%s42 + $0x8] sm:$0xff]
          %47 = vst [vmem:[%s43 + $0x8] sm:$0xff] %v46
        $region25: #{tpu_custom_call.1} parent=19 // loop_footer
          %s41 = sadd.s32 1, %s37
        $region26: #{tpu_custom_call.1} parent=19 // loop_footer_branch
          %36 = sbr.rel target = $region22
        $region27: #{tpu_custom_call.1} parent=19 // loop_exit
          _
      $region20: #{tpu_custom_call.1} parent=4 // pred_fallthru
        _
      %p48 = pneg %p32
      // Predicated region
      $region28: #{tpu_custom_call.1} parent=4 // pred_check
        _
      $region29: #{tpu_custom_call.1} parent=4 // pred_check_branch
        %50 = sbr.rel (%p32) target = $region31
      $region30: #{tpu_custom_call.1} parent=4 // pred_region
        %s51 = sand.u32 16, 7
      $region31: #{tpu_custom_call.1} parent=4 // pred_fallthru
        _
    $region5: #{tpu_custom_call.1} parent=1 // pred_fallthru
      _
    // Predicated region
    $region6: #{tpu_custom_call.1} parent=1 // pred_check
      %p17 = pneg %p13
    $region7: #{tpu_custom_call.1} parent=1 // pred_check_branch
      %19 = sbr.rel (%p17) target = $region9
    $region8: #{tpu_custom_call.1} parent=1 // pred_region
      %s20 = sshllo.u32 0, 16
      loop: start=0, step=1, limit=1
      $region10: #{tpu_custom_call.1} parent=8 // loop_pre_header
        _
      $region11: #{tpu_custom_call.1} parent=8 // loop_header
        %s22 = sphi 0, %s26
        %p23 = scmp.ge.s32.totalorder %s22, 1
        %s27 = sphi %s11, %s11
        %s28 = sphi [#allocation2], [#allocation2]
      $region12: #{tpu_custom_call.1} parent=8 // loop_header_branch
        %25 = sbr.rel (%p23) target = $region16
      $region13: #{tpu_custom_call.1} parent=8 // loop_body
        %v29 = vld [vmem:[%s27] sm:%s20]
        %30 = vst [vmem:[%s28] sm:%s20] %v29
      $region14: #{tpu_custom_call.1} parent=8 // loop_footer
        %s26 = sadd.s32 1, %s22
      $region15: #{tpu_custom_call.1} parent=8 // loop_footer_branch
        %21 = sbr.rel target = $region11
      $region16: #{tpu_custom_call.1} parent=8 // loop_exit
        _
    $region9: #{tpu_custom_call.1} parent=1 // pred_fallthru
      _
    // Predicated region
    $region32: #{tpu_custom_call.1} parent=1 // pred_check
      _
    $region33: #{tpu_custom_call.1} parent=1 // pred_check_branch
      %54 = sbr.rel (0) target = $region35
    $region34: #{tpu_custom_call.1} parent=1 // pred_region
      %55 = vsyncadd [#allocation3], 256
    $region35: #{tpu_custom_call.1} parent=1 // pred_fallthru
      _
    %s56 = sadd.s32 %s10, 2
    %s57 = scalar_lea.vmem %s1, %s56
    %s58 = scalar_lea.vmem %s3, %s10
    %s59 = scalar_lea.sflag [#allocation3], 1
    %p61 = scmp.lt.u32.totalorder 12, 8
    %p62 = pneg %p61
    // Predicated region
    $region36: #{tpu_custom_call.1} parent=1 // pred_check
      _
    $region37: #{tpu_custom_call.1} parent=1 // pred_check_branch
      %64 = sbr.rel (%p61) target = $region39
    $region38: #{tpu_custom_call.1} parent=1 // pred_region
      %s79 = sand.u32 12, 7
      %p80 = scmp.eq.s32.totalorder %s79, 0
      %p81 = pneg %p80
      // Predicated region
      $region51: #{tpu_custom_call.1} parent=38 // pred_check
        _
      $region52: #{tpu_custom_call.1} parent=38 // pred_check_branch
        %83 = sbr.rel (%p80) target = $region54
      $region53: #{tpu_custom_call.1} parent=38 // pred_region
        %s84 = sand.u32 12, 7
        %s85 = ssub.s32 12, %s84
        %s86 = scalar_lea.vmem %s57, %s85
        %s87 = ssub.s32 12, %s84
        %s88 = scalar_lea.vmem %s58, %s87
        loop: start=0, step=1, limit=1
        $region55: #{tpu_custom_call.1} parent=53 // loop_pre_header
          _
        $region56: #{tpu_custom_call.1} parent=53 // loop_header
          %s90 = sphi 0, %s94
          %p91 = scmp.ge.s32.totalorder %s90, 1
          %s95 = sphi %s57, %s57
          %s96 = sphi %s58, %s58
        $region57: #{tpu_custom_call.1} parent=53 // loop_header_branch
          %93 = sbr.rel (%p91) target = $region61
        $region58: #{tpu_custom_call.1} parent=53 // loop_body
          %v97 = vld [vmem:[%s95] sm:$0xff]
          %98 = vst [vmem:[%s96] sm:$0xff] %v97
        $region59: #{tpu_custom_call.1} parent=53 // loop_footer
          %s94 = sadd.s32 1, %s90
        $region60: #{tpu_custom_call.1} parent=53 // loop_footer_branch
          %89 = sbr.rel target = $region56
        $region61: #{tpu_custom_call.1} parent=53 // loop_exit
          _
        %s99 = sshllo.u32 0, %s84
        loop: start=0, step=1, limit=1
        $region62: #{tpu_custom_call.1} parent=53 // loop_pre_header
          _
        $region63: #{tpu_custom_call.1} parent=53 // loop_header
          %s101 = sphi 0, %s105
          %p102 = scmp.ge.s32.totalorder %s101, 1
          %s106 = sphi %s86, %s86
          %s107 = sphi %s88, %s88
        $region64: #{tpu_custom_call.1} parent=53 // loop_header_branch
          %104 = sbr.rel (%p102) target = $region68
        $region65: #{tpu_custom_call.1} parent=53 // loop_body
          %v108 = vld [vmem:[%s106] sm:%s99]
          %109 = vst [vmem:[%s107] sm:%s99] %v108
        $region66: #{tpu_custom_call.1} parent=53 // loop_footer
          %s105 = sadd.s32 1, %s101
        $region67: #{tpu_custom_call.1} parent=53 // loop_footer_branch
          %100 = sbr.rel target = $region63
        $region68: #{tpu_custom_call.1} parent=53 // loop_exit
          _
      $region54: #{tpu_custom_call.1} parent=38 // pred_fallthru
        _
    $region39: #{tpu_custom_call.1} parent=1 // pred_fallthru
      _
    // Predicated region
    $region40: #{tpu_custom_call.1} parent=1 // pred_check
      %p65 = pneg %p61
    $region41: #{tpu_custom_call.1} parent=1 // pred_check_branch
      %67 = sbr.rel (%p65) target = $region43
    $region42: #{tpu_custom_call.1} parent=1 // pred_region
      %s68 = sshllo.u32 0, 12
      loop: start=0, step=1, limit=1
      $region44: #{tpu_custom_call.1} parent=42 // loop_pre_header
        _
      $region45: #{tpu_custom_call.1} parent=42 // loop_header
        %s70 = sphi 0, %s74
        %p71 = scmp.ge.s32.totalorder %s70, 1
        %s75 = sphi %s57, %s57
        %s76 = sphi %s58, %s58
      $region46: #{tpu_custom_call.1} parent=42 // loop_header_branch
        %73 = sbr.rel (%p71) target = $region50
      $region47: #{tpu_custom_call.1} parent=42 // loop_body
        %v77 = vld [vmem:[%s75] sm:%s68]
        %78 = vst [vmem:[%s76] sm:%s68] %v77
      $region48: #{tpu_custom_call.1} parent=42 // loop_footer
        %s74 = sadd.s32 1, %s70
      $region49: #{tpu_custom_call.1} parent=42 // loop_footer_branch
        %69 = sbr.rel target = $region45
      $region50: #{tpu_custom_call.1} parent=42 // loop_exit
        _
    $region43: #{tpu_custom_call.1} parent=1 // pred_fallthru
      _
    // Predicated region
    $region69: #{tpu_custom_call.1} parent=1 // pred_check
      _
    $region70: #{tpu_custom_call.1} parent=1 // pred_check_branch
      %112 = sbr.rel (0) target = $region72
    $region71: #{tpu_custom_call.1} parent=1 // pred_region
      %113 = vsyncadd %s59, 192
    $region72: #{tpu_custom_call.1} parent=1 // pred_fallthru
      _
    %s114 = smul.u32 16, 1
    %s115 = sshll.u32 %s114, 4
    %116 = dma.done [#allocation3], %s115
    %v117 = vld [vmem:[#allocation2] sm:$0xff]
    %v118 = vld [vmem:[#allocation2 + $0x8] sm:$0xff]
    %vm121 = vcmask 1046528
    %v122 = vrot.slane %v117, 1
    %v123 = vrot.slane %v118, 1
    %v124 = vsel %vm121, %v122, %v123
    %125 = vrot.lane.b32.xlu0 %v124, 32
    %v126 = vpop.permute.xlu0 %125
    %127 = vrot.lane.b32.xlu0 %v123, 32
    %v128 = vpop.permute.xlu0 %127
    %vm131 = vcmask 1045504
    %v132 = vrot.slane %v117, 2
    %v133 = vrot.slane %v118, 2
    %v134 = vsel %vm131, %v132, %v133
    %135 = vrot.lane.b32.xlu0 %v134, 64
    %v136 = vpop.permute.xlu0 %135
    %137 = vrot.lane.b32.xlu0 %v133, 64
    %v138 = vpop.permute.xlu0 %137
    %vm141 = vcmask 1044480
    %v142 = vrot.slane %v117, 3
    %v143 = vrot.slane %v118, 3
    %v144 = vsel %vm141, %v142, %v143
    %145 = vrot.lane.b32.xlu0 %v144, 96
    %v146 = vpop.permute.xlu0 %145
    %147 = vrot.lane.b32.xlu0 %v143, 96
    %v148 = vpop.permute.xlu0 %147
    %vm151 = vcmask 1043456
    %v152 = vrot.slane %v117, 4
    %v153 = vrot.slane %v118, 4
    %v154 = vsel %vm151, %v152, %v153
    %vm157 = vcmask 261120
    %v158 = vsel %vm157, %v117, %v126
    %v159 = vsel %vm157, %v118, %v128
    %vm160 = vcmask 523264
    %v161 = vsel %vm160, %v158, %v136
    %v162 = vsel %vm160, %v159, %v138
    %vm163 = vcmask 785408
    %v164 = vsel %vm163, %v161, %v146
    %v165 = vsel %vm163, %v162, %v148
    %166 = vst [vmem:[#allocation4] sm:$0xff] %v164
    %167 = vst.msk [vmem:[#allocation4 + $0x8] sm:$0xff] %vm157, %v154
    %168 = vst [vmem:[#allocation4 + $0x10] sm:$0xf] %v165
    %vm169 = vcmask 257024
    %170 = vst.msk [vmem:[#allocation4 + $0x18] sm:$0xf] %vm169, %v153
    %s171 = smul.u32 12, 1
    %s172 = sshll.u32 %s171, 4
    %173 = dma.done %s59, %s172
    // Predicated region
    $region73: #{tpu_custom_call.1} parent=1 // pred_check
      _
    $region74: #{tpu_custom_call.1} parent=1 // pred_check_branch
      %175 = sbr.rel (0) target = $region76
    $region75: #{tpu_custom_call.1} parent=1 // pred_region
      %s177 = ssub.s32 512, 512
      %178 = vsyncadd [#allocation5], %s177
      %s179 = sshll.u32 [#allocation4], 4
      %s180 = int_to_ptr.vmem [resolvable:$true] %s179
      %185 = dma.vmem_to_hbm [thread:$0]  %s180, 512, %s2, [#allocation5], 256, 256, 16
    $region76: #{tpu_custom_call.1} parent=1 // pred_fallthru
      _
    // Predicated region
    $region77: #{tpu_custom_call.1} parent=1 // pred_check
      _
    $region78: #{tpu_custom_call.1} parent=1 // pred_check_branch
      %187 = sbr.rel (0) target = $region80
    $region79: #{tpu_custom_call.1} parent=1 // pred_region
      %188 = dma.done [#allocation5], 512
    $region80: #{tpu_custom_call.1} parent=1 // pred_fallthru
      _
    %189 = vsyncpa [#allocation5], 1
  %190 = vsyncmov [#allocation3]
  %s191 = vpop.sfrf %190
  %p192 = scmp.eq.s32.totalorder %s191, 0
  %p193 = pneg %p192
  %195 = shalt.err (%p193)
  %s196 = scalar_lea.sflag [#allocation3], 1
  %197 = vsyncmov %s196
  %s198 = vpop.sfrf %197
  %p199 = scmp.eq.s32.totalorder %s198, 0
  %p200 = pneg %p199
  %202 = shalt.err (%p200)

</llo_original>
